<compile_context>
chip_gen: v7x
topology: tpu7x:2x2x1
jax: 0.10.0
libtpu: 0.0.40
codegen_flags: <defaults>
</compile_context>

<pallas_src>
import functools

import jax
import jax.numpy as jnp
from jax.experimental import pallas as pl
from jax.experimental.pallas import tpu as pltpu


def _round_up(x, m):
    return ((x + m - 1) // m) * m


def _cross_output_kernel(h_ref, x_ref, w_ref, b_ref, g_ref, beta_ref, o_ref,
                         *, inv_h, eps):
    # h_ref:    (TM, I)   hidden_states row-tile (native dtype)
    # x_ref:    (TM, Hp)  residual row-tile (native dtype)
    # w_ref:    (I, Hp)   dense weight, "in x out" layout (= W^T), padded cols are 0
    # b_ref:    (1, Hp)   dense bias        (padded cols 0, f32)
    # g_ref:    (1, Hp)   layernorm gamma   (padded cols 0, f32)
    # beta_ref: (1, Hp)   layernorm beta    (padded cols 0, f32)
    # o_ref:    (TM, Hp)  output row-tile

    # Linear: native-dtype operands on the MXU, f32 accumulation.
    y = jnp.dot(h_ref[...], w_ref[...], preferred_element_type=jnp.float32)

    # Bias + residual (dropout is identity in eval mode).  Promotes to f32.
    y = y + b_ref[...] + x_ref[...]

    # TF-style LayerNorm over the *real* hidden dim.  Padded columns of y are exactly
    # zero (zero weight cols / bias / residual), so they contribute nothing to the
    # sums; multiplying by 1/H_real gives the correct statistics in a single pass.
    s1 = jnp.sum(y, axis=-1, keepdims=True)
    s2 = jnp.sum(y * y, axis=-1, keepdims=True)
    u = s1 * inv_h
    var = jnp.maximum(s2 * inv_h - u * u, 0.0)
    y_norm = (y - u) * jax.lax.rsqrt(var + eps)

    o_ref[...] = (g_ref[...] * y_norm + beta_ref[...]).astype(o_ref.dtype)


def cross_output(hidden_states, input_tensor, w_dense, b_dense, ln_gamma, ln_beta,
                 *, row_tile=512, eps=1e-12):
    """hidden_states: (B, S, I), input_tensor: (B, S, H) -> (B, S, H).

    w_dense is the (I, H) = W^T layout so y = h @ w_dense.
    """
    B, S, I = hidden_states.shape
    H = input_tensor.shape[-1]
    N = B * S

    # ---- padding / tiling choices ---------------------------------------------------
    Hp = _round_up(H, 128)                       # lane-dense output stores
    TM = row_tile if N >= row_tile else _round_up(N, 8)

    h_item = jnp.dtype(hidden_states.dtype).itemsize
    x_item = jnp.dtype(input_tensor.dtype).itemsize
    w_item = jnp.dtype(w_dense.dtype).itemsize
    o_item = h_item

    w_bytes = I * Hp * w_item
    params_bytes = 3 * Hp * 4                    # bias/gamma/beta kept in f32

    def _pipelined_bytes(tm):
        # double-buffered h / x / out tiles
        return 2 * tm * (I * h_item + Hp * x_item + Hp * o_item)

    VMEM_BUDGET = 32 * 1024 * 1024               # conservative across v5e/v6e/v7x
    while TM > 8 and w_bytes + params_bytes + _pipelined_bytes(TM) > VMEM_BUDGET:
        TM = max(8, TM // 2)

    Np = _round_up(N, TM)
    grid = (Np // TM,)

    # ---- zero-pad operands ----------------------------------------------------------
    h2 = hidden_states.reshape(N, I)
    x2 = input_tensor.reshape(N, H)
    if Np != N:
        h2 = jnp.pad(h2, ((0, Np - N), (0, 0)))
        x2 = jnp.pad(x2, ((0, Np - N), (0, 0)))
    if Hp != H:
        x2 = jnp.pad(x2, ((0, 0), (0, Hp - H)))
        w = jnp.pad(w_dense, ((0, 0), (0, Hp - H)))
        b = jnp.pad(b_dense, (0, Hp - H))
        g = jnp.pad(ln_gamma, (0, Hp - H))
        beta = jnp.pad(ln_beta, (0, Hp - H))
    else:
        w, b, g, beta = w_dense, b_dense, ln_gamma, ln_beta

    b2 = b.reshape(1, Hp).astype(jnp.float32)
    g2 = g.reshape(1, Hp).astype(jnp.float32)
    beta2 = beta.reshape(1, Hp).astype(jnp.float32)

    # ---- compiler hints ---------------------------------------------------------------
    vmem_need = w_bytes + params_bytes + _pipelined_bytes(TM)
    vmem_limit = int(min(vmem_need + (8 << 20), 48 << 20))

    cost = pl.CostEstimate(
        flops=2 * Np * I * Hp,
        transcendentals=0,
        bytes_accessed=(Np * I * h_item + Np * Hp * x_item
                        + I * Hp * w_item + Np * Hp * o_item),
    )

    kernel = functools.partial(_cross_output_kernel, inv_h=1.0 / H, eps=eps)

    out = pl.pallas_call(
        kernel,
        out_shape=jax.ShapeDtypeStruct((Np, Hp), hidden_states.dtype),
        grid_spec=pltpu.PrefetchScalarGridSpec(
            num_scalar_prefetch=0,
            grid=grid,
            in_specs=[
                pl.BlockSpec((TM, I), lambda i: (i, 0)),    # hidden_states rows
                pl.BlockSpec((TM, Hp), lambda i: (i, 0)),   # residual rows
                pl.BlockSpec((I, Hp), lambda i: (0, 0)),    # weight (VMEM resident)
                pl.BlockSpec((1, Hp), lambda i: (0, 0)),    # bias
                pl.BlockSpec((1, Hp), lambda i: (0, 0)),    # gamma
                pl.BlockSpec((1, Hp), lambda i: (0, 0)),    # beta
            ],
            out_specs=pl.BlockSpec((TM, Hp), lambda i: (i, 0)),
        ),
        compiler_params=pltpu.CompilerParams(
            dimension_semantics=("parallel",),
            vmem_limit_bytes=vmem_limit,
        ),
        cost_estimate=cost,
    )(h2, x2, w, b2, g2, beta2)

    return out[:N, :H].reshape(B, S, H)


def cross_output_ref(hidden_states, input_tensor, w_dense, b_dense, ln_gamma, ln_beta):
    y = jnp.einsum("bsi,ih->bsh", hidden_states, w_dense) + b_dense
    y = y + input_tensor
    u = jnp.mean(y, axis=-1, keepdims=True)
    s = jnp.mean((y - u) ** 2, axis=-1, keepdims=True)
    y = (y - u) / jnp.sqrt(s + 1e-12)
    return ln_gamma * y + ln_beta


if __name__ == "__main__":
    # Small shapes consistent with the module: batch=2, seq=8,
    # intermediate_size=64, hidden_size=32.
    B, S, I, H = 2, 8, 64, 32

    key = jax.random.PRNGKey(0)
    k_h, k_x, k_w, k_b = jax.random.split(key, 4)

    hidden_states = jax.random.normal(k_h, (B, S, I), dtype=jnp.float32)
    input_tensor = jax.random.normal(k_x, (B, S, H), dtype=jnp.float32)

    # PyTorch nn.Linear weight is (H, I); kernel uses (I, H) = W^T so that y = h @ W^T.
    w_dense = jax.random.normal(k_w, (I, H), dtype=jnp.float32) * 0.02
    b_dense = jax.random.normal(k_b, (H,), dtype=jnp.float32) * 0.02
    ln_gamma = jnp.ones((H,), dtype=jnp.float32)
    ln_beta = jnp.zeros((H,), dtype=jnp.float32)

    out = cross_output(hidden_states, input_tensor,
                       w_dense, b_dense, ln_gamma, ln_beta)
    out = jax.block_until_ready(out)

    ref = cross_output_ref(hidden_states, input_tensor,
                           w_dense, b_dense, ln_gamma, ln_beta)
    assert out.shape == (B, S, H)
    assert jnp.allclose(out, ref, atol=2e-5, rtol=2e-5), "mismatch vs reference"

    print("KERNEL_OK")
</pallas_src>

<mosaic_0001>
module attributes {stable_mosaic.version = 11 : i64} {
  func.func @_cross_output_kernel(%arg0: i32, %arg1: memref<16x64xf32, #tpu.memory_space<vmem>>, %arg2: memref<16x128xf32, #tpu.memory_space<vmem>>, %arg3: memref<64x128xf32, #tpu.memory_space<vmem>>, %arg4: memref<1x128xf32, #tpu.memory_space<vmem>>, %arg5: memref<1x128xf32, #tpu.memory_space<vmem>>, %arg6: memref<1x128xf32, #tpu.memory_space<vmem>>, %arg7: memref<16x128xf32, #tpu.memory_space<vmem>>) attributes {dimension_semantics = [#tpu.dimension_semantics<parallel>], iteration_bounds = array<i64: 1>, scalar_prefetch = 0 : i64, scratch_operands = 0 : i64, tpu.core_type = #tpu.core_type<tc>, window_params = [{transform_indices = @transform_0, window_bounds = array<i64: 16, 64>}, {transform_indices = @transform_1, window_bounds = array<i64: 16, 128>}, {pipeline_mode = #tpu.pipeline_mode<synchronous>, transform_indices = @transform_2, window_bounds = array<i64: 64, 128>}, {pipeline_mode = #tpu.pipeline_mode<synchronous>, transform_indices = @transform_3, window_bounds = array<i64: 1, 128>}, {pipeline_mode = #tpu.pipeline_mode<synchronous>, transform_indices = @transform_4, window_bounds = array<i64: 1, 128>}, {pipeline_mode = #tpu.pipeline_mode<synchronous>, transform_indices = @transform_5, window_bounds = array<i64: 1, 128>}, {transform_indices = @transform_6, window_bounds = array<i64: 16, 128>}]} {
    %c0 = arith.constant 0 : index
    %c0_0 = arith.constant 0 : index
    %0 = vector.load %arg1[%c0, %c0_0] : memref<16x64xf32, #tpu.memory_space<vmem>>, vector<16x64xf32>
    %c0_1 = arith.constant 0 : index
    %c0_2 = arith.constant 0 : index
    %1 = vector.load %arg3[%c0_1, %c0_2] : memref<64x128xf32, #tpu.memory_space<vmem>>, vector<64x128xf32>
    %cst = arith.constant dense<0.000000e+00> : vector<16x128xf32>
    %2 = tpu.matmul %0, %1, %cst {dimension_numbers = #tpu.dot_dimension_numbers<[1], [0], [0], [1], [0, 0, 1, 1], [], []>} : vector<16x64xf32>, vector<64x128xf32>, vector<16x128xf32> -> vector<16x128xf32>
    %c0_3 = arith.constant 0 : index
    %c0_4 = arith.constant 0 : index
    %3 = vector.load %arg4[%c0_3, %c0_4] : memref<1x128xf32, #tpu.memory_space<vmem>>, vector<1x128xf32>
    %4 = vector.broadcast %3 : vector<1x128xf32> to vector<16x128xf32>
    %5 = arith.addf %2, %4 : vector<16x128xf32>
    %c0_5 = arith.constant 0 : index
    %c0_6 = arith.constant 0 : index
    %6 = vector.load %arg2[%c0_5, %c0_6] : memref<16x128xf32, #tpu.memory_space<vmem>>, vector<16x128xf32>
    %7 = arith.addf %5, %6 : vector<16x128xf32>
    %cst_7 = arith.constant dense<0.000000e+00> : vector<16xf32>
    %8 = vector.multi_reduction <add>, %7, %cst_7 [1] : vector<16x128xf32> to vector<16xf32>
    %9 = vector.shape_cast %8 : vector<16xf32> to vector<16x1xf32>
    %10 = arith.mulf %7, %7 : vector<16x128xf32>
    %cst_8 = arith.constant dense<0.000000e+00> : vector<16xf32>
    %11 = vector.multi_reduction <add>, %10, %cst_8 [1] : vector<16x128xf32> to vector<16xf32>
    %12 = vector.shape_cast %11 : vector<16xf32> to vector<16x1xf32>
    %cst_9 = arith.constant 3.125000e-02 : f32
    %13 = vector.broadcast %cst_9 : f32 to vector<16x1xf32>
    %14 = arith.mulf %9, %13 : vector<16x1xf32>
    %cst_10 = arith.constant 3.125000e-02 : f32
    %15 = vector.broadcast %cst_10 : f32 to vector<16x1xf32>
    %16 = arith.mulf %12, %15 : vector<16x1xf32>
    %17 = arith.mulf %14, %14 : vector<16x1xf32>
    %18 = arith.subf %16, %17 : vector<16x1xf32>
    %cst_11 = arith.constant 0.000000e+00 : f32
    %19 = vector.broadcast %cst_11 : f32 to vector<16x1xf32>
    %20 = arith.maximumf %18, %19 : vector<16x1xf32>
    %21 = vector.broadcast %14 : vector<16x1xf32> to vector<16x128xf32>
    %22 = arith.subf %7, %21 : vector<16x128xf32>
    %cst_12 = arith.constant 9.99999996E-13 : f32
    %23 = vector.broadcast %cst_12 : f32 to vector<16x1xf32>
    %24 = arith.addf %20, %23 : vector<16x1xf32>
    %25 = math.rsqrt %24 : vector<16x1xf32>
    %26 = vector.broadcast %25 : vector<16x1xf32> to vector<16x128xf32>
    %27 = arith.mulf %22, %26 : vector<16x128xf32>
    %c0_13 = arith.constant 0 : index
    %c0_14 = arith.constant 0 : index
    %28 = vector.load %arg5[%c0_13, %c0_14] : memref<1x128xf32, #tpu.memory_space<vmem>>, vector<1x128xf32>
    %29 = vector.broadcast %28 : vector<1x128xf32> to vector<16x128xf32>
    %30 = arith.mulf %29, %27 : vector<16x128xf32>
    %c0_15 = arith.constant 0 : index
    %c0_16 = arith.constant 0 : index
    %31 = vector.load %arg6[%c0_15, %c0_16] : memref<1x128xf32, #tpu.memory_space<vmem>>, vector<1x128xf32>
    %32 = vector.broadcast %31 : vector<1x128xf32> to vector<16x128xf32>
    %33 = arith.addf %30, %32 : vector<16x128xf32>
    %c0_17 = arith.constant 0 : index
    %c0_18 = arith.constant 0 : index
    %34 = vector.load %arg7[%c0_17, %c0_18] : memref<16x128xf32, #tpu.memory_space<vmem>>, vector<16x128xf32>
    tpu.vector_store %arg7[%c0_17, %c0_18], %33 {strides = array<i32>} : memref<16x128xf32, #tpu.memory_space<vmem>>, vector<16x128xf32>,
    return
  }
  func.func @transform_0(%arg0: i32) -> (i32, i32) {
    %c0_i32 = arith.constant 0 : i32
    %c0_i32_0 = arith.constant 0 : i32
    return %arg0, %c0_i32 : i32, i32
  }
  func.func @transform_1(%arg0: i32) -> (i32, i32) {
    %c0_i32 = arith.constant 0 : i32
    %c0_i32_0 = arith.constant 0 : i32
    return %arg0, %c0_i32 : i32, i32
  }
  func.func @transform_2(%arg0: i32) -> (i32, i32) {
    %c0_i32 = arith.constant 0 : i32
    %c0_i32_0 = arith.constant 0 : i32
    %c0_i32_1 = arith.constant 0 : i32
    return %c0_i32, %c0_i32_0 : i32, i32
  }
  func.func @transform_3(%arg0: i32) -> (i32, i32) {
    %c0_i32 = arith.constant 0 : i32
    %c0_i32_0 = arith.constant 0 : i32
    %c0_i32_1 = arith.constant 0 : i32
    return %c0_i32, %c0_i32_0 : i32, i32
  }
  func.func @transform_4(%arg0: i32) -> (i32, i32) {
    %c0_i32 = arith.constant 0 : i32
    %c0_i32_0 = arith.constant 0 : i32
    %c0_i32_1 = arith.constant 0 : i32
    return %c0_i32, %c0_i32_0 : i32, i32
  }
  func.func @transform_5(%arg0: i32) -> (i32, i32) {
    %c0_i32 = arith.constant 0 : i32
    %c0_i32_0 = arith.constant 0 : i32
    %c0_i32_1 = arith.constant 0 : i32
    return %c0_i32, %c0_i32_0 : i32, i32
  }
  func.func @transform_6(%arg0: i32) -> (i32, i32) {
    %c0_i32 = arith.constant 0 : i32
    %c0_i32_0 = arith.constant 0 : i32
    return %arg0, %c0_i32 : i32, i32
  }
}

</mosaic_0001>

<llo_original>
// kernel: tpu_custom_call.1
$region0: #{tpu_custom_call.1}
  #allocation0 [shape = 'u32[]', space=smem, size = 0x4, offset = 0x4, fixed_abs, tag = 'smem constant byte address 0x4 - core index']
  #allocation1 [shape = 'u32[144,128]{1,0:T(1,128)}', space=vmem, size = 0x12000, scoped, tag = 'internal scratch']
  %s0 = inlined_call_operand.hbm [shape: f32[16,64], index: 0, kind: input, shape index: {}]
  %s1 = inlined_call_operand.hbm [shape: f32[16,128], index: 1, kind: input, shape index: {}]
  %s2 = inlined_call_operand.hbm [shape: f32[64,128], index: 2, kind: input, shape index: {}]
  %s3 = inlined_call_operand.vmem [shape: f32[1,128], index: 3, kind: input, shape index: {}]
  %s4 = inlined_call_operand.vmem [shape: f32[1,128], index: 4, kind: input, shape index: {}]
  %s5 = inlined_call_operand.vmem [shape: f32[1,128], index: 5, kind: input, shape index: {}]
  %s6 = inlined_call_operand.hbm [shape: f32[16,128], index: 6, kind: output, shape index: {}]
  %s7 = sld [smem:[#allocation0]]
  $region46: #{tpu_custom_call.1} parent=0
    _
  %s9 = ssub.s32 1, %s7
  %s10 = scalar_select 0, %s9, %s7
  $region1: #{tpu_custom_call.1} parent=0
    #allocation2 [shape = 'u8[8192]{0}', space=vmem, size = 0x2000, scoped, tag = 'input window, operand 0, single buffered']
    #allocation3 [shape = 's32[1]{0}', space=sflag, size = 0x4, scoped, tag = 'scoped memory for tpu_custom_call.1']
    #allocation4 [shape = 's32[1]{0}', space=sflag, size = 0x4, scoped, tag = 'scoped memory for tpu_custom_call.1']
    #allocation5 [shape = 'u8[8192]{0}', space=vmem, size = 0x2000, scoped, tag = 'input window, operand 1, single buffered']
    #allocation6 [shape = 's32[1]{0}', space=sflag, size = 0x4, scoped, tag = 'scoped memory for tpu_custom_call.1']
    #allocation7 [shape = 'u8[32768]{0}', space=vmem, size = 0x8000, scoped, tag = 'input window, operand 2, single buffered']
    #allocation8 [shape = 'u8[8192]{0}', space=vmem, size = 0x2000, scoped, tag = 'output window, operand 0, single buffered']
    %11 = vsyncpa [#allocation3], 0
    %12 = vsyncpa [#allocation6], 0
    %13 = vsyncpa [#allocation4], 0
    // Predicated region
    $region2: #{tpu_custom_call.1} parent=1 // pred_check
      _
    $region3: #{tpu_custom_call.1} parent=1 // pred_check_branch
      %15 = sbr.rel (0) target = $region5
    $region4: #{tpu_custom_call.1} parent=1 // pred_region
      %s17 = ssub.s32 256, 256
      %18 = vsyncadd [#allocation3], %s17
      %s19 = sshll.u32 [#allocation2], 4
      %s20 = int_to_ptr.vmem [resolvable:$true] %s19
      %25 = dma.hbm_to_vmem [thread:$0]  %s0, 256, %s20, [#allocation3], 128, 128, 8
    $region5: #{tpu_custom_call.1} parent=1 // pred_fallthru
      _
    // Predicated region
    $region6: #{tpu_custom_call.1} parent=1 // pred_check
      _
    $region7: #{tpu_custom_call.1} parent=1 // pred_check_branch
      %27 = sbr.rel (0) target = $region9
    $region8: #{tpu_custom_call.1} parent=1 // pred_region
      %s29 = ssub.s32 256, 256
      %30 = vsyncadd [#allocation6], %s29
      %s31 = sshll.u32 [#allocation5], 4
      %s32 = int_to_ptr.vmem [resolvable:$true] %s31
      %37 = dma.hbm_to_vmem [thread:$0]  %s1, 256, %s32, [#allocation6], 128, 128, 8
    $region9: #{tpu_custom_call.1} parent=1 // pred_fallthru
      _
    // Predicated region
    $region10: #{tpu_custom_call.1} parent=1 // pred_check
      _
    $region11: #{tpu_custom_call.1} parent=1 // pred_check_branch
      %39 = sbr.rel (0) target = $region13
    $region12: #{tpu_custom_call.1} parent=1 // pred_region
      %s41 = ssub.s32 1024, 1024
      %42 = vsyncadd [#allocation6], %s41
      %s43 = sshll.u32 [#allocation7], 4
      %s44 = int_to_ptr.vmem [resolvable:$true] %s43
      %49 = dma.hbm_to_vmem [thread:$0]  %s2, 1024, %s44, [#allocation6], 128, 128, 8
    $region13: #{tpu_custom_call.1} parent=1 // pred_fallthru
      _
    // Predicated region
    $region14: #{tpu_custom_call.1} parent=1 // pred_check
      _
    $region15: #{tpu_custom_call.1} parent=1 // pred_check_branch
      %51 = sbr.rel (0) target = $region17
    $region16: #{tpu_custom_call.1} parent=1 // pred_region
      _
    $region17: #{tpu_custom_call.1} parent=1 // pred_fallthru
      _
    // Predicated region
    $region18: #{tpu_custom_call.1} parent=1 // pred_check
      _
    $region19: #{tpu_custom_call.1} parent=1 // pred_check_branch
      %53 = sbr.rel (0) target = $region21
    $region20: #{tpu_custom_call.1} parent=1 // pred_region
      _
    $region21: #{tpu_custom_call.1} parent=1 // pred_fallthru
      _
    // Predicated region
    $region22: #{tpu_custom_call.1} parent=1 // pred_check
      _
    $region23: #{tpu_custom_call.1} parent=1 // pred_check_branch
      %55 = sbr.rel (0) target = $region25
    $region24: #{tpu_custom_call.1} parent=1 // pred_region
      _
    $region25: #{tpu_custom_call.1} parent=1 // pred_fallthru
      _
    // Predicated region
    $region26: #{tpu_custom_call.1} parent=1 // pred_check
      _
    $region27: #{tpu_custom_call.1} parent=1 // pred_check_branch
      %57 = sbr.rel (0) target = $region29
    $region28: #{tpu_custom_call.1} parent=1 // pred_region
      %58 = dma.done [#allocation3], 256
    $region29: #{tpu_custom_call.1} parent=1 // pred_fallthru
      _
    // Predicated region
    $region30: #{tpu_custom_call.1} parent=1 // pred_check
      _
    $region31: #{tpu_custom_call.1} parent=1 // pred_check_branch
      %60 = sbr.rel (0) target = $region33
    $region32: #{tpu_custom_call.1} parent=1 // pred_region
      %61 = dma.done [#allocation6], 256
    $region33: #{tpu_custom_call.1} parent=1 // pred_fallthru
      _
    // Predicated region
    $region34: #{tpu_custom_call.1} parent=1 // pred_check
      _
    $region35: #{tpu_custom_call.1} parent=1 // pred_check_branch
      %63 = sbr.rel (0) target = $region37
    $region36: #{tpu_custom_call.1} parent=1 // pred_region
      %64 = dma.done [#allocation6], 1024
    $region37: #{tpu_custom_call.1} parent=1 // pred_fallthru
      _
    %v65 = vld [vmem:[#allocation2] sm:$0xff]
    %v66 = vld [vmem:[#allocation2 + $0x8] sm:$0xff]
    %v67 = vld [vmem:[#allocation7] sm:$0xff]
    %v68 = vld [vmem:[#allocation7 + $0x8] sm:$0xff]
    %v69 = vld [vmem:[#allocation7 + $0x10] sm:$0xff]
    %v70 = vld [vmem:[#allocation7 + $0x18] sm:$0xff]
    %v71 = vld [vmem:[#allocation7 + $0x20] sm:$0xff]
    %v72 = vld [vmem:[#allocation7 + $0x28] sm:$0xff]
    %v73 = vld [vmem:[#allocation7 + $0x30] sm:$0xff]
    %v74 = vld [vmem:[#allocation7 + $0x38] sm:$0xff]
    %v75 = vld [vmem:[%s3] sm:$0x1]
    %v77 = vlaneseq
    %v78 = vshrl.u32 %v77, 7
    %v79 = vsub.s32 0, %v78
    %v80 = vrot.slane %v75, %v79
    %vm82 = vcmask 523264
    %v84 = vsel %vm82, %v65, 0
    %v87 = vsel %vm82, %v66, 0
    %89 = vmatprep.subr.mxu0 0.0
    %90 = vmatpush1.msra.mxu0 %v67
    %91 = vmatprep.subr.mxu0 0.0
    %92 = vmatpush1.msra.mxu0 %v68
    %93 = vmatprep.subr.mxu0 0.0
    %94 = vmatpush1.msra.mxu0 %v69
    %95 = vmatprep.subr.mxu0 0.0
    %96 = vmatpush1.msra.mxu0 %v70
    %97 = vmatprep.subr.mxu0 0.0
    %98 = vmatpush1.msra.mxu0 %v71
    %99 = vmatprep.subr.mxu0 0.0
    %100 = vmatpush1.msra.mxu0 %v72
    %101 = vmatprep.subr.mxu0 0.0
    %102 = vmatpush1.msra.mxu0 %v73
    %103 = vmatprep.subr.mxu0 0.0
    %104 = vmatpush1.msra.mxu0 %v74
    %105 = vmatprep.subr.mxu0 0.0
    %106 = vmatpush1.msra.mxu0 0.0
    %107 = vmatprep.subr.mxu0 0.0
    %108 = vmatpush1.msra.mxu0 0.0
    %109 = vmatprep.subr.mxu0 0.0
    %110 = vmatpush1.msra.mxu0 0.0
    %111 = vmatprep.subr.mxu0 0.0
    %112 = vmatpush1.msra.mxu0 0.0
    %113 = vmatprep.subr.mxu0 0.0
    %114 = vmatpush1.msra.mxu0 0.0
    %115 = vmatprep.subr.mxu0 0.0
    %116 = vmatpush1.msra.mxu0 0.0
    %117 = vmatprep.subr.mxu0 0.0
    %118 = vmatpush1.msra.mxu0 0.0
    %119 = vmatprep.subr.mxu0 0.0
    %120 = vmatpush1.msra.mxu0 0.0
    %121 = vmatprep.subr.mxu0 0.0
    %122 = vmatpush1.msra.mxu0 0.0
    %123 = vmatprep.subr.mxu0 0.0
    %124 = vmatpush1.msra.mxu0 0.0
    %125 = vmatprep.subr.mxu0 0.0
    %126 = vmatpush1.msra.mxu0 0.0
    %127 = vmatprep.subr.mxu0 0.0
    %128 = vmatpush1.msra.mxu0 0.0
    %129 = vmatprep.subr.mxu0 0.0
    %130 = vmatpush1.msra.mxu0 0.0
    %131 = vmatprep.subr.mxu0 0.0
    %132 = vmatpush1.msra.mxu0 0.0
    %133 = vmatprep.subr.mxu0 0.0
    %134 = vmatpush1.msra.mxu0 0.0
    %135 = vmatprep.subr.mxu0 0.0
    %136 = vmatpush1.msra.mxu0 0.0
    %137 = vmatprep.subr.mxu0 0.0
    %138 = vmatpush1.msra.mxu0 0.0
    %139 = vmatprep.subr.mxu0 0.0
    %140 = vmatpush1.msra.mxu0 0.0
    %141 = vmatprep.subr.mxu0 0.0
    %142 = vmatpush1.msra.mxu0 0.0
    %143 = vmatprep.subr.mxu0 0.0
    %144 = vmatpush1.msra.mxu0 0.0
    %145 = vmatprep.subr.mxu0 0.0
    %146 = vmatpush1.msra.mxu0 0.0
    %147 = vmatprep.subr.mxu0 0.0
    %148 = vmatpush1.msra.mxu0 0.0
    %149 = vmatprep.subr.mxu0 0.0
    %150 = vmatpush1.msra.mxu0 0.0
    %151 = vmatprep.subr.mxu0 0.0
    %152 = vmatpush1.msra.mxu0 0.0
    %153 = vmatprep.mubr.f32.mxu0 0.0
    %154 = vmatmul.mubr.f32.gmra.mrb[0].mxu0 %v84
    %v155 = vpop.f32.mrb[0].mxu0
    %v156 = vadd.f32 %v80, %v155
    %v157 = vpop.f32.mrb[0].mxu0
    %158 = vmatprep.mubr.f32.mxu0 0.0
    %159 = vmatmul.mubr.f32.gmra.mrb[0].mxu0 %v87
    %v160 = vpop.f32.mrb[0].mxu0
    %v161 = vadd.f32 %v80, %v160
    %v162 = vpop.f32.mrb[0].mxu0
    %163 = vdwg.mxu0
    %v164 = vld [vmem:[#allocation5] sm:$0xff]
    %v165 = vld [vmem:[#allocation5 + $0x8] sm:$0xff]
    %v166 = vadd.f32 %v156, %v164
    %v167 = vadd.f32 %v161, %v165
    %168 = vadd.xlane.f32.xlu0 %v166
    %v169 = vpop.xlane.xlu0 %168
    %170 = vadd.xlane.f32.xlu0 %v167
    %v171 = vpop.xlane.xlu0 %170
    %v172 = vmul.f32 %v166, %v166
    %v173 = vmul.f32 %v167, %v167
    %174 = vadd.xlane.f32.xlu0 %v172
    %v175 = vpop.xlane.xlu0 %174
    %176 = vadd.xlane.f32.xlu0 %v173
    %v177 = vpop.xlane.xlu0 %176
    %v178 = vmul.f32 %v169, 0.03125
    %v179 = vmul.f32 %v171, 0.03125
    %v180 = vmul.f32 %v175, 0.03125
    %v181 = vmul.f32 %v177, 0.03125
    %v182 = vmul.f32 %v178, %v178
    %v183 = vmul.f32 %v179, %v179
    %v184 = vsub.f32 %v180, %v182
    %v185 = vsub.f32 %v181, %v183
    %v186 = vmax.f32 %v184, 0.0
    %v187 = vmax.f32 %v185, 0.0
    %v188 = vsub.f32 %v166, %v178
    %v189 = vsub.f32 %v167, %v179
    %v190 = vadd.f32 %v186, 1e-12
    %v191 = vadd.f32 %v187, 1e-12
    %v192 = vrsqrt.pop %v190
    %v193 = vrsqrt.pop %v191
    %v194 = vmul.f32 %v188, %v192
    %v195 = vmul.f32 %v189, %v193
    %v196 = vld [vmem:[%s4] sm:$0x1]
    %v198 = vlaneseq
    %v199 = vshrl.u32 %v198, 7
    %v200 = vsub.s32 0, %v199
    %v201 = vrot.slane %v196, %v200
    %v203 = vmul.f32 %v201, %v194
    %v204 = vmul.f32 %v201, %v195
    %v205 = vld [vmem:[%s5] sm:$0x1]
    %v207 = vlaneseq
    %v208 = vshrl.u32 %v207, 7
    %v209 = vsub.s32 0, %v208
    %v210 = vrot.slane %v205, %v209
    %v212 = vadd.f32 %v203, %v210
    %v213 = vadd.f32 %v204, %v210
    %214 = vst [vmem:[#allocation8] sm:$0xff] %v212
    %215 = vst [vmem:[#allocation8 + $0x8] sm:$0xff] %v213
    // Predicated region
    $region38: #{tpu_custom_call.1} parent=1 // pred_check
      _
    $region39: #{tpu_custom_call.1} parent=1 // pred_check_branch
      %217 = sbr.rel (0) target = $region41
    $region40: #{tpu_custom_call.1} parent=1 // pred_region
      %s219 = ssub.s32 256, 256
      %220 = vsyncadd [#allocation4], %s219
      %s221 = sshll.u32 [#allocation8], 4
      %s222 = int_to_ptr.vmem [resolvable:$true] %s221
      %227 = dma.vmem_to_hbm [thread:$0]  %s222, 256, %s6, [#allocation4], 128, 128, 8
    $region41: #{tpu_custom_call.1} parent=1 // pred_fallthru
      _
    // Predicated region
    $region42: #{tpu_custom_call.1} parent=1 // pred_check
      _
    $region43: #{tpu_custom_call.1} parent=1 // pred_check_branch
      %229 = sbr.rel (0) target = $region45
    $region44: #{tpu_custom_call.1} parent=1 // pred_region
      %230 = dma.done [#allocation4], 256
    $region45: #{tpu_custom_call.1} parent=1 // pred_fallthru
      _
    %231 = vsyncpa [#allocation3], 1
    %232 = vsyncpa [#allocation6], 1
    %233 = vsyncpa [#allocation4], 1

</llo_original>
